<compile_context>
chip_gen: v6e
topology: v6e:2x2x1
jax: 0.10.0
libtpu: 0.0.40
codegen_flags: <defaults>
</compile_context>

<pallas_src>
import functools

import jax
import jax.numpy as jnp
from jax import lax
from jax.experimental import pallas as pl
from jax.experimental.pallas import tpu as pltpu


def _regression_loss_kernel(pred_ref, target_ref, iou_ref, out_ref, acc_ref,
                            *, positive_reg_lb):
    i = pl.program_id(0)

    @pl.when(i == 0)
    def _init():
        acc_ref[0] = 0.0   # weighted SmoothL1 sum
        acc_ref[1] = 0.0   # n_pos

    pred = pred_ref[...]      # (8, TN) f32, rows 0..6 = box params, row 7 = pad
    target = target_ref[...]  # (8, TN) f32
    iou = iou_ref[...]        # (1, TN) f32 (padding columns hold -1e30)

    # SmoothL1 element-wise (beta = 1.0, torch default)
    d = pred - target
    ad = jnp.abs(d)
    el = jnp.where(ad < 1.0, 0.5 * d * d, ad - 0.5)          # (8, TN)

    # Per-row weights: loc rows 0-2 -> 1/3, size rows 3-5 -> 1, rot row 6 -> 1,
    # pad row 7 -> 0.   (l_loc + 3*l_size + l_rot == sum(el*w) / n_pos)
    row = lax.broadcasted_iota(jnp.int32, (8, 1), 0)
    w = jnp.where(row < 3, jnp.float32(1.0 / 3.0),
                  jnp.where(row < 7, jnp.float32(1.0), jnp.float32(0.0)))

    pos = iou >= positive_reg_lb                              # (1, TN) bool
    elw = jnp.where(pos, el * w, 0.0)                         # broadcast over rows

    acc_ref[0] = acc_ref[0] + jnp.sum(elw)
    acc_ref[1] = acc_ref[1] + jnp.sum(jnp.where(pos, 1.0, 0.0))

    @pl.when(i == pl.num_programs(0) - 1)
    def _finalize():
        n_pos = acc_ref[1]
        total = acc_ref[0]
        loss = jnp.where(n_pos > 0.0, total / jnp.maximum(n_pos, 1.0), 0.0)
        out_ref[0] = loss


def regression_loss(pred, target, iou, *, positive_reg_lb=0.55, block_n=32768):
    """pred: (N,7) f32, target: (N,7) f32, iou: (N,) f32 -> (1,) f32 loss.

    NOTE: for very small N (a few thousand rows or less) the pure-JAX
    `regression_loss_ref` path is at least as fast (Pallas launch overhead
    dominates); the kernel exists for the large-N regime.
    """
    pred = jnp.asarray(pred, jnp.float32)
    target = jnp.asarray(target, jnp.float32)
    iou = jnp.asarray(iou, jnp.float32)
    n = pred.shape[0]

    # Lane-dense padded layout: columns = boxes (multiple of 128 / block_n),
    # rows = 7 box params padded to 8 sublanes.
    n128 = ((n + 127) // 128) * 128
    if n128 <= block_n:
        tn = n128
        n_pad = n128
    else:
        tn = block_n
        n_pad = ((n + tn - 1) // tn) * tn
    grid_n = n_pad // tn

    pred_t = jnp.zeros((8, n_pad), jnp.float32).at[:7, :n].set(pred.T)
    target_t = jnp.zeros((8, n_pad), jnp.float32).at[:7, :n].set(target.T)
    iou_t = jnp.full((1, n_pad), -1e30, jnp.float32).at[0, :n].set(iou)

    kernel = functools.partial(_regression_loss_kernel,
                               positive_reg_lb=float(positive_reg_lb))

    cost = pl.CostEstimate(
        flops=int(10 * 8 * n_pad),
        transcendentals=0,
        bytes_accessed=int((8 + 8 + 1) * 4 * n_pad + 4),
    )

    out = pl.pallas_call(
        kernel,
        out_shape=jax.ShapeDtypeStruct((1,), jnp.float32),
        grid_spec=pltpu.PrefetchScalarGridSpec(
            num_scalar_prefetch=0,
            grid=(grid_n,),
            in_specs=[
                pl.BlockSpec((8, tn), lambda i: (0, i)),   # pred   (8, N) tile
                pl.BlockSpec((8, tn), lambda i: (0, i)),   # target (8, N) tile
                pl.BlockSpec((1, tn), lambda i: (0, i)),   # iou    (1, N) tile
            ],
            out_specs=pl.BlockSpec(memory_space=pltpu.SMEM),  # scalar loss
            scratch_shapes=[pltpu.SMEM((2,), jnp.float32)],   # [sum, n_pos]
        ),
        compiler_params=pltpu.CompilerParams(
            dimension_semantics=("arbitrary",),
        ),
        cost_estimate=cost,
    )(pred_t, target_t, iou_t)
    return out


def regression_loss_ref(pred, target, iou, positive_reg_lb=0.55):
    """Pure-JAX reference replicating the torch module semantics."""
    mask = (iou >= positive_reg_lb).astype(jnp.float32)
    n = jnp.sum(mask)

    def smooth_l1_mean(a, b, nelem_per_row):
        d = a - b
        ad = jnp.abs(d)
        el = jnp.where(ad < 1.0, 0.5 * d * d, ad - 0.5)
        el = el * mask.reshape(-1, 1)
        return jnp.sum(el) / jnp.maximum(n * nelem_per_row, 1.0)

    l_loc = smooth_l1_mean(pred[:, 0:3], target[:, 0:3], 3.0)
    l_size = smooth_l1_mean(pred[:, 3:6], target[:, 3:6], 3.0)
    l_rot = smooth_l1_mean(pred[:, 6:7], target[:, 6:7], 1.0)
    return jnp.where(n > 0, l_loc + 3.0 * l_size + l_rot, 0.0)


if __name__ == "__main__":
    key = jax.random.PRNGKey(0)
    k1, k2, k3, k4, k5, k6 = jax.random.split(key, 6)

    config = {"positive_reg_lb": 0.55}

    # NOTE: docstring says pred is (N,1) but the forward slices pred[:, 0:3],
    # pred[:, 3:6], pred[:, 6] -> pred is actually (N,7) like target.

    # Small case (single grid step).
    N = 16
    pred = jax.random.normal(k1, (N, 7), dtype=jnp.float32)
    target = jax.random.normal(k2, (N, 7), dtype=jnp.float32)
    iou = jax.random.uniform(k3, (N,), dtype=jnp.float32)

    loss = regression_loss(pred, target, iou,
                           positive_reg_lb=config["positive_reg_lb"])
    jax.block_until_ready(loss)
    ref = regression_loss_ref(pred, target, iou, config["positive_reg_lb"])
    assert jnp.allclose(loss[0], ref, atol=1e-5, rtol=1e-5), (loss, ref)

    # "No positive samples" branch returns 0.
    loss0 = regression_loss(pred, target, jnp.zeros((N,), jnp.float32),
                            positive_reg_lb=config["positive_reg_lb"])
    jax.block_until_ready(loss0)
    assert float(loss0[0]) == 0.0

    # Larger case with a small block so the multi-step grid accumulation
    # (pl.when init/finalize + SMEM scratch) is exercised.
    N2 = 300
    pred2 = jax.random.normal(k4, (N2, 7), dtype=jnp.float32)
    target2 = jax.random.normal(k5, (N2, 7), dtype=jnp.float32)
    iou2 = jax.random.uniform(k6, (N2,), dtype=jnp.float32)

    loss2 = regression_loss(pred2, target2, iou2,
                            positive_reg_lb=config["positive_reg_lb"],
                            block_n=128)
    jax.block_until_ready(loss2)
    ref2 = regression_loss_ref(pred2, target2, iou2, config["positive_reg_lb"])
    assert jnp.allclose(loss2[0], ref2, atol=1e-5, rtol=1e-5), (loss2, ref2)

    print("KERNEL_OK")
</pallas_src>

<mosaic_0001>
module attributes {stable_mosaic.version = 11 : i64} {
  func.func @_regression_loss_kernel(%arg0: i32, %arg1: memref<8x128xf32, #tpu.memory_space<vmem>>, %arg2: memref<8x128xf32, #tpu.memory_space<vmem>>, %arg3: memref<1x128xf32, #tpu.memory_space<vmem>>, %arg4: memref<1xf32, #tpu.memory_space<smem>>, %arg5: memref<2xf32, #tpu.memory_space<smem>>) attributes {dimension_semantics = [#tpu.dimension_semantics<arbitrary>], iteration_bounds = array<i64: 1>, scalar_prefetch = 0 : i64, scratch_operands = 1 : i64, tpu.core_type = #tpu.core_type<tc>, window_params = [{transform_indices = @transform_0, window_bounds = array<i64: 8, 128>}, {transform_indices = @transform_1, window_bounds = array<i64: 8, 128>}, {transform_indices = @transform_2, window_bounds = array<i64: 1, 128>}, {transform_indices = @transform_3, window_bounds = array<i64: 1>}]} {
    %c0_i32 = arith.constant 0 : i32
    %0 = arith.cmpi eq, %arg0, %c0_i32 : i32
    %1 = arith.extui %0 : i1 to i32
    %c0_i32_0 = arith.constant 0 : i32
    %2 = arith.cmpi ne, %1, %c0_i32_0 : i32
    scf.if %2 {
      %cst_22 = arith.constant 0.000000e+00 : f32
      %c0_23 = arith.constant 0 : index
      %54 = memref.load %arg5[%c0_23] : memref<2xf32, #tpu.memory_space<smem>>
      memref.store %cst_22, %arg5[%c0_23] : memref<2xf32, #tpu.memory_space<smem>>
      %cst_24 = arith.constant 0.000000e+00 : f32
      %c1_25 = arith.constant 1 : index
      %55 = memref.load %arg5[%c1_25] : memref<2xf32, #tpu.memory_space<smem>>
      memref.store %cst_24, %arg5[%c1_25] : memref<2xf32, #tpu.memory_space<smem>>
    } else {
    }
    %c0 = arith.constant 0 : index
    %c0_1 = arith.constant 0 : index
    %3 = vector.load %arg1[%c0, %c0_1] : memref<8x128xf32, #tpu.memory_space<vmem>>, vector<8x128xf32>
    %c0_2 = arith.constant 0 : index
    %c0_3 = arith.constant 0 : index
    %4 = vector.load %arg2[%c0_2, %c0_3] : memref<8x128xf32, #tpu.memory_space<vmem>>, vector<8x128xf32>
    %c0_4 = arith.constant 0 : index
    %c0_5 = arith.constant 0 : index
    %5 = vector.load %arg3[%c0_4, %c0_5] : memref<1x128xf32, #tpu.memory_space<vmem>>, vector<1x128xf32>
    %6 = arith.subf %3, %4 : vector<8x128xf32>
    %7 = math.absf %6 : vector<8x128xf32>
    %cst = arith.constant 1.000000e+00 : f32
    %8 = vector.broadcast %cst : f32 to vector<8x128xf32>
    %9 = arith.cmpf olt, %7, %8 : vector<8x128xf32>
    %cst_6 = arith.constant 5.000000e-01 : f32
    %10 = vector.broadcast %cst_6 : f32 to vector<8x128xf32>
    %11 = arith.mulf %10, %6 : vector<8x128xf32>
    %12 = arith.mulf %11, %6 : vector<8x128xf32>
    %cst_7 = arith.constant 5.000000e-01 : f32
    %13 = vector.broadcast %cst_7 : f32 to vector<8x128xf32>
    %14 = arith.subf %7, %13 : vector<8x128xf32>
    %15 = arith.select %9, %12, %14 : vector<8x128xi1>, vector<8x128xf32>
    %16 = tpu.iota {dimensions = array<i32: 0>} : vector<8x1xi32>
    %c3_i32 = arith.constant 3 : i32
    %17 = vector.broadcast %c3_i32 : i32 to vector<8x1xi32>
    %18 = arith.cmpi slt, %16, %17 : vector<8x1xi32>
    %c7_i32 = arith.constant 7 : i32
    %19 = vector.broadcast %c7_i32 : i32 to vector<8x1xi32>
    %20 = arith.cmpi slt, %16, %19 : vector<8x1xi32>
    %cst_8 = arith.constant 1.000000e+00 : f32
    %cst_9 = arith.constant 0.000000e+00 : f32
    %21 = vector.broadcast %cst_8 : f32 to vector<8x1xf32>
    %22 = vector.broadcast %cst_9 : f32 to vector<8x1xf32>
    %23 = arith.select %20, %21, %22 : vector<8x1xi1>, vector<8x1xf32>
    %cst_10 = arith.constant 0.333333343 : f32
    %24 = vector.broadcast %cst_10 : f32 to vector<8x1xf32>
    %25 = arith.select %18, %24, %23 : vector<8x1xi1>, vector<8x1xf32>
    %cst_11 = arith.constant 5.500000e-01 : f32
    %26 = vector.broadcast %cst_11 : f32 to vector<1x128xf32>
    %27 = arith.cmpf oge, %5, %26 : vector<1x128xf32>
    %28 = vector.broadcast %25 : vector<8x1xf32> to vector<8x128xf32>
    %29 = arith.mulf %15, %28 : vector<8x128xf32>
    %cst_12 = arith.constant 0.000000e+00 : f32
    %30 = vector.shape_cast %27 : vector<1x128xi1> to vector<1x128xi1>
    %31 = vector.broadcast %30 : vector<1x128xi1> to vector<8x128xi1>
    %32 = vector.broadcast %cst_12 : f32 to vector<8x128xf32>
    %33 = arith.select %31, %29, %32 : vector<8x128xi1>, vector<8x128xf32>
    %c0_13 = arith.constant 0 : index
    %34 = memref.load %arg5[%c0_13] : memref<2xf32, #tpu.memory_space<smem>>
    %35 = vector.shape_cast %33 : vector<8x128xf32> to vector<1x8x128xf32>
    %cst_14 = arith.constant dense<0.000000e+00> : vector<1xf32>
    %36 = vector.multi_reduction <add>, %35, %cst_14 [1, 2] : vector<1x8x128xf32> to vector<1xf32>
    %37 = vector.shape_cast %36 : vector<1xf32> to vector<1x1x1xf32>
    %38 = vector.extract %37[0, 0, 0] : f32 from vector<1x1x1xf32>
    %39 = arith.addf %34, %38 : f32
    %c0_15 = arith.constant 0 : index
    %40 = memref.load %arg5[%c0_15] : memref<2xf32, #tpu.memory_space<smem>>
    memref.store %39, %arg5[%c0_15] : memref<2xf32, #tpu.memory_space<smem>>
    %c1 = arith.constant 1 : index
    %41 = memref.load %arg5[%c1] : memref<2xf32, #tpu.memory_space<smem>>
    %cst_16 = arith.constant 1.000000e+00 : f32
    %cst_17 = arith.constant 0.000000e+00 : f32
    %42 = vector.broadcast %cst_16 : f32 to vector<1x128xf32>
    %43 = vector.broadcast %cst_17 : f32 to vector<1x128xf32>
    %44 = arith.select %27, %42, %43 : vector<1x128xi1>, vector<1x128xf32>
    %45 = vector.shape_cast %44 : vector<1x128xf32> to vector<1x1x128xf32>
    %cst_18 = arith.constant dense<0.000000e+00> : vector<1xf32>
    %46 = vector.multi_reduction <add>, %45, %cst_18 [1, 2] : vector<1x1x128xf32> to vector<1xf32>
    %47 = vector.shape_cast %46 : vector<1xf32> to vector<1x1x1xf32>
    %48 = vector.extract %47[0, 0, 0] : f32 from vector<1x1x1xf32>
    %49 = arith.addf %41, %48 : f32
    %c1_19 = arith.constant 1 : index
    %50 = memref.load %arg5[%c1_19] : memref<2xf32, #tpu.memory_space<smem>>
    memref.store %49, %arg5[%c1_19] : memref<2xf32, #tpu.memory_space<smem>>
    %c0_i32_20 = arith.constant 0 : i32
    %51 = arith.cmpi eq, %arg0, %c0_i32_20 : i32
    %52 = arith.extui %51 : i1 to i32
    %c0_i32_21 = arith.constant 0 : i32
    %53 = arith.cmpi ne, %52, %c0_i32_21 : i32
    scf.if %53 {
      %c1_22 = arith.constant 1 : index
      %54 = memref.load %arg5[%c1_22] : memref<2xf32, #tpu.memory_space<smem>>
      %c0_23 = arith.constant 0 : index
      %55 = memref.load %arg5[%c0_23] : memref<2xf32, #tpu.memory_space<smem>>
      %cst_24 = arith.constant 0.000000e+00 : f32
      %56 = arith.cmpf ogt, %54, %cst_24 : f32
      %cst_25 = arith.constant 1.000000e+00 : f32
      %57 = arith.maximumf %54, %cst_25 : f32
      %58 = arith.divf %55, %57 : f32
      %cst_26 = arith.constant 0.000000e+00 : f32
      %59 = arith.select %56, %58, %cst_26 : f32
      %c0_27 = arith.constant 0 : index
      %60 = memref.load %arg4[%c0_27] : memref<1xf32, #tpu.memory_space<smem>>
      memref.store %59, %arg4[%c0_27] : memref<1xf32, #tpu.memory_space<smem>>
    } else {
    }
    return
  }
  func.func @transform_0(%arg0: i32) -> (i32, i32) {
    %c0_i32 = arith.constant 0 : i32
    %c0_i32_0 = arith.constant 0 : i32
    return %c0_i32, %arg0 : i32, i32
  }
  func.func @transform_1(%arg0: i32) -> (i32, i32) {
    %c0_i32 = arith.constant 0 : i32
    %c0_i32_0 = arith.constant 0 : i32
    return %c0_i32, %arg0 : i32, i32
  }
  func.func @transform_2(%arg0: i32) -> (i32, i32) {
    %c0_i32 = arith.constant 0 : i32
    %c0_i32_0 = arith.constant 0 : i32
    return %c0_i32, %arg0 : i32, i32
  }
  func.func @transform_3(%arg0: i32) -> i32 {
    %c0_i32 = arith.constant 0 : i32
    %c0_i32_0 = arith.constant 0 : i32
    return %c0_i32 : i32
  }
}

</mosaic_0001>

<llo_original>
// kernel: tpu_custom_call.1
$region0: #{tpu_custom_call.1}
  #allocation0 [shape = 'u32[]', space=smem, size = 0x4, offset = 0x4, fixed_abs, tag = 'smem constant byte address 0x4 - core index']
  #allocation1 [shape = 'u32[144,128]{1,0:T(1,128)}', space=vmem, size = 0x12000, scoped, tag = 'internal scratch']
  #allocation2 [shape = 'f32[2]{0:T(128)}', space=smem, size = 0x200, scoped, tag = 'scratch operand']
  %s0 = inlined_call_operand.hbm [shape: f32[8,128], index: 0, kind: input, shape index: {}]
  %s1 = inlined_call_operand.hbm [shape: f32[8,128], index: 1, kind: input, shape index: {}]
  %s2 = inlined_call_operand.vmem [shape: f32[1,128], index: 2, kind: input, shape index: {}]
  %s3 = inlined_call_operand.hbm [shape: f32[1], index: 3, kind: output, shape index: {}]
  %s4 = sld [smem:[#allocation0]]
  $region38: #{tpu_custom_call.1} parent=0
    _
  %s6 = ssub.s32 1, %s4
  %s7 = scalar_select 0, %s6, %s4
  $region1: #{tpu_custom_call.1} parent=0
    #allocation3 [shape = 'u8[4096]{0}', space=vmem, size = 0x1000, scoped, tag = 'input window, operand 0, single buffered']
    #allocation4 [shape = 's32[1]{0}', space=sflag, size = 0x4, scoped, tag = 'scoped memory for tpu_custom_call.1']
    #allocation5 [shape = 's32[1]{0}', space=sflag, size = 0x4, scoped, tag = 'scoped memory for tpu_custom_call.1']
    #allocation6 [shape = 'u8[4096]{0}', space=vmem, size = 0x1000, scoped, tag = 'input window, operand 1, single buffered']
    #allocation7 [shape = 's32[1]{0}', space=sflag, size = 0x4, scoped, tag = 'scoped memory for tpu_custom_call.1']
    #allocation8 [shape = 'u8[512]{0}', space=smem, size = 0x200, scoped, tag = 'output window, operand 0, single buffered']
    %8 = vsyncpa [#allocation4], 0
    %9 = vsyncpa [#allocation7], 0
    %10 = vsyncpa [#allocation5], 0
    // Predicated region
    $region2: #{tpu_custom_call.1} parent=1 // pred_check
      _
    $region3: #{tpu_custom_call.1} parent=1 // pred_check_branch
      %12 = sbr.rel (0) target = $region5
    $region4: #{tpu_custom_call.1} parent=1 // pred_region
      %s14 = ssub.s32 128, 128
      %15 = vsyncadd [#allocation4], %s14
      %s17 = sshll.u32 [#allocation3], 4
      %s18 = int_to_ptr.vmem [resolvable:$true] %s17
      %20 = dma.hbm_to_vmem [thread:$0]  %s0, 128, %s18, [#allocation4]
    $region5: #{tpu_custom_call.1} parent=1 // pred_fallthru
      _
    // Predicated region
    $region6: #{tpu_custom_call.1} parent=1 // pred_check
      _
    $region7: #{tpu_custom_call.1} parent=1 // pred_check_branch
      %22 = sbr.rel (0) target = $region9
    $region8: #{tpu_custom_call.1} parent=1 // pred_region
      %s24 = ssub.s32 128, 128
      %25 = vsyncadd [#allocation7], %s24
      %s27 = sshll.u32 [#allocation6], 4
      %s28 = int_to_ptr.vmem [resolvable:$true] %s27
      %30 = dma.hbm_to_vmem [thread:$0]  %s1, 128, %s28, [#allocation7]
    $region9: #{tpu_custom_call.1} parent=1 // pred_fallthru
      _
    // Predicated region
    $region10: #{tpu_custom_call.1} parent=1 // pred_check
      _
    $region11: #{tpu_custom_call.1} parent=1 // pred_check_branch
      %32 = sbr.rel (0) target = $region13
    $region12: #{tpu_custom_call.1} parent=1 // pred_region
      _
    $region13: #{tpu_custom_call.1} parent=1 // pred_fallthru
      _
    // Predicated region
    $region14: #{tpu_custom_call.1} parent=1 // pred_check
      _
    $region15: #{tpu_custom_call.1} parent=1 // pred_check_branch
      %34 = sbr.rel (0) target = $region17
    $region16: #{tpu_custom_call.1} parent=1 // pred_region
      %35 = dma.done [#allocation4], 128
    $region17: #{tpu_custom_call.1} parent=1 // pred_fallthru
      _
    // Predicated region
    $region18: #{tpu_custom_call.1} parent=1 // pred_check
      _
    $region19: #{tpu_custom_call.1} parent=1 // pred_check_branch
      %37 = sbr.rel (0) target = $region21
    $region20: #{tpu_custom_call.1} parent=1 // pred_region
      %38 = dma.done [#allocation7], 128
    $region21: #{tpu_custom_call.1} parent=1 // pred_fallthru
      _
    %p39 = scmp.eq.s32.totalorder 0, 0
    // Predicated region
    $region22: #{tpu_custom_call.1} parent=1 // pred_check
      %p40 = pneg %p39
    $region23: #{tpu_custom_call.1} parent=1 // pred_check_branch
      %42 = sbr.rel (%p40) target = $region25
    $region24: #{tpu_custom_call.1} parent=1 // pred_region
      %s43 = scalar_lea.smem [#allocation2], 0
      %44 = sst [smem:[%s43]] 0.0
      %s45 = scalar_lea.smem [#allocation2], 1
      %46 = sst [smem:[%s45]] 0.0
    $region25: #{tpu_custom_call.1} parent=1 // pred_fallthru
      _
    %v47 = vld [vmem:[#allocation3] sm:$0xff]
    %v48 = vld [vmem:[#allocation6] sm:$0xff]
    %v49 = vld [vmem:[%s2] sm:$0x1]
    %v50 = vsub.f32 %v47, %v48
    %v51 = vand.u32 2147483647, %v50
    %vm52 = vcmp.lt.f32.partialorder %v51, 1.0
    %v53 = vmul.f32 %v50, 0.5
    %v54 = vmul.f32 %v53, %v50
    %v55 = vsub.f32 %v51, 0.5
    %v56 = vsel %vm52, %v54, %v55
    %v57 = vlaneseq
    %v58 = vshrl.u32 %v57, 7
    %vm59 = vcmp.lt.s32.totalorder %v58, 3
    %vm60 = vcmp.lt.s32.totalorder %v58, 7
    %v61 = vsel %vm60, 1.0, 0.0
    %v62 = vsel %vm59, 0.33333334, %v61
    %vm63 = vcmp.ge.f32.partialorder %v49, 0.55
    %v64 = vmul.f32 %v56, %v62
    %v65 = vsel %vm63, 1, 0
    %v66 = vlaneseq
    %v67 = vshrl.u32 %v66, 7
    %v68 = vsub.s32 0, %v67
    %v69 = vrot.slane %v65, %v68
    %vm70 = vcmp.eq.s32.totalorder %v69, 1
    %v71 = vsel %vm70, %v64, 0.0
    %s72 = sld [smem:[#allocation2]]
    %73 = vadd.xlane.f32.xlu0 %v71
    %v74 = vpop.xlane.xlu0 %73
    %v75 = vrot.slane %v74, 4
    %v76 = vadd.f32 %v74, %v75
    %v77 = vrot.slane %v76, 2
    %v78 = vadd.f32 %v76, %v77
    %v79 = vrot.slane %v78, 1
    %v80 = vadd.f32 %v78, %v79
    %s81 = vtos %v80
    %s82 = sadd.f32 %s72, %s81
    %s83 = scalar_lea.smem [#allocation2], 0
    %84 = sst [smem:[%s83]] %s82
    %s85 = sld [smem:[#allocation2 + $0x1]]
    %v86 = vsel %vm63, 1.0, 0.0
    %vm87 = vcmask 1040384
    %v88 = vsel %vm87, %v86, 0.0
    %89 = vadd.xlane.f32.xlu0 %v88
    %v90 = vpop.xlane.xlu0 %89
    %v91 = vrot.slane %v90, 4
    %v92 = vadd.f32 %v90, %v91
    %v93 = vrot.slane %v92, 2
    %v94 = vadd.f32 %v92, %v93
    %v95 = vrot.slane %v94, 1
    %v96 = vadd.f32 %v94, %v95
    %s97 = vtos %v96
    %s98 = sadd.f32 %s85, %s97
    %s99 = scalar_lea.smem [#allocation2], 1
    %100 = sst [smem:[%s99]] %s98
    // Predicated region
    $region26: #{tpu_custom_call.1} parent=1 // pred_check
      %p101 = pneg %p39
    $region27: #{tpu_custom_call.1} parent=1 // pred_check_branch
      %103 = sbr.rel (%p101) target = $region29
    $region28: #{tpu_custom_call.1} parent=1 // pred_region
      %s104 = sld [smem:[#allocation2 + $0x1]]
      %s105 = sld [smem:[#allocation2]]
      %p106 = scmp.gt.f32.partialorder %s104, 0.0
      %s107 = smax.f32 %s104, 1.0
      %v108 = vstv %s107
      %v109 = vrcp.pop %v108
      %s110 = vtos %v109
      %s111 = smul.f32 %s105, %s110
      %s112 = scalar_select %p106, %s111, 0.0
      %s113 = scalar_lea.smem [#allocation8], 0
      %114 = sst [smem:[%s113]] %s112
    $region29: #{tpu_custom_call.1} parent=1 // pred_fallthru
      _
    // Predicated region
    $region30: #{tpu_custom_call.1} parent=1 // pred_check
      _
    $region31: #{tpu_custom_call.1} parent=1 // pred_check_branch
      %116 = sbr.rel (0) target = $region33
    $region32: #{tpu_custom_call.1} parent=1 // pred_region
      %s118 = ssub.s32 16, 16
      %119 = vsyncadd [#allocation5], %s118
      %122 = dma.smem_to_hbm [#allocation8], 16, %s3, [#allocation5]
    $region33: #{tpu_custom_call.1} parent=1 // pred_fallthru
      _
    // Predicated region
    $region34: #{tpu_custom_call.1} parent=1 // pred_check
      _
    $region35: #{tpu_custom_call.1} parent=1 // pred_check_branch
      %124 = sbr.rel (0) target = $region37
    $region36: #{tpu_custom_call.1} parent=1 // pred_region
      %125 = dma.done [#allocation5], 16
    $region37: #{tpu_custom_call.1} parent=1 // pred_fallthru
      _
    %126 = sfence
    %127 = vsyncpa [#allocation4], 1
    %128 = vsyncpa [#allocation7], 1
    %129 = vsyncpa [#allocation5], 1

</llo_original>
